<compile_context>
chip_gen: v6e
topology: v6e:2x2x1
jax: 0.10.0
libtpu: 0.0.40
codegen_flags: <defaults>
</compile_context>

<pallas_src>
from functools import partial

import jax
import jax.numpy as jnp
from jax.experimental import pallas as pl
from jax.experimental.pallas import tpu as pltpu

LANE = 128          # TPU lane width (lane-dense output slab)
IN_FEATURES = 1024
H1, H2 = 64, 32


def mlp_kernel(x_ref, w1_ref, w2_ref, w3_ref, b_ref, o_ref):
    """Fused Linear(1024,64)+ReLU -> Linear(64,32)+ReLU -> Linear(32,128-pad).

    x arrives f32 and is cast to bf16 in-kernel (VPU); bf16 operands drive the
    MXU in a single pass, accumulation stays f32 via preferred_element_type.
    Biases / adds / ReLUs run in f32 on the VPU.  The output is a lane-dense
    (B, 128) f32 slab.
    """
    x = x_ref[...].astype(jnp.bfloat16)              # (B, 1024) bf16, cast folded in
    b = b_ref[...]                                   # (8, 128)  f32 packed biases

    h1 = jnp.dot(x, w1_ref[...], preferred_element_type=jnp.float32)
    h1 = jnp.maximum(h1 + b[0:1, 0:H1], 0.0)         # (B, 64) f32

    h2 = jnp.dot(h1.astype(jnp.bfloat16), w2_ref[...],
                 preferred_element_type=jnp.float32)
    h2 = jnp.maximum(h2 + b[1:2, 0:H2], 0.0)         # (B, 32) f32

    o_ref[...] = jnp.dot(h2.astype(jnp.bfloat16), w3_ref[...],
                         preferred_element_type=jnp.float32) + b[2:3, :]


def init_params(key, num_outputs):
    """Deterministic init matching nn.Linear's default U(-1/sqrt(fan_in), +1/sqrt(fan_in))."""
    dims = [(IN_FEATURES, H1), (H1, H2), (H2, num_outputs)]
    params = []
    for (fan_in, fan_out) in dims:
        key, kw, kb = jax.random.split(key, 3)
        bound = 1.0 / jnp.sqrt(float(fan_in))
        w = jax.random.uniform(kw, (fan_in, fan_out), jnp.float32, -bound, bound)
        b = jax.random.uniform(kb, (1, fan_out), jnp.float32, -bound, bound)
        params += [w, b]
    return tuple(params)


def prepare_params(params, num_outputs):
    """One-time parameter prep (hoisted out of the forward path).

    Casts w1/w2 to bf16, pads w3 to a lane-dense (32,128) bf16 slab and packs
    the three sub-lane-width biases into a single (8,128) f32 operand
    (row0=b1, row1=b2, row2=b3).  Do this once at init; the forward then only
    moves already-prepped device buffers.
    """
    w1, b1, w2, b2, w3, b3 = params
    w1_bf = jnp.asarray(w1, jnp.bfloat16)
    w2_bf = jnp.asarray(w2, jnp.bfloat16)
    w3_pad = (jnp.zeros((H2, LANE), jnp.float32)
              .at[:, :num_outputs].set(w3)
              .astype(jnp.bfloat16))
    b_pack = (jnp.zeros((8, LANE), jnp.float32)
              .at[0, :H1].set(jnp.reshape(b1, (-1,)))
              .at[1, :H2].set(jnp.reshape(b2, (-1,)))
              .at[2, :num_outputs].set(jnp.reshape(b3, (-1,))))
    return w1_bf, w2_bf, w3_pad, b_pack


@partial(jax.jit, static_argnums=(2,))
def regressor_forward(data, prepped, num_outputs):
    # TODO(synk): self.model (the wrapped backbone) is treated as identity;
    # plug its Pallas/JAX forward here if it is ever non-trivial.
    B = data.shape[0]
    x = data.reshape(B, -1).astype(jnp.float32)      # nn.Flatten (row-major, free reshape)
    assert x.shape[1] == IN_FEATURES, f"flattened feature dim must be 1024, got {x.shape[1]}"

    w1_bf, w2_bf, w3_pad, b_pack = prepped

    flops = 2 * B * (IN_FEATURES * H1 + H1 * H2 + H2 * LANE)
    bytes_accessed = (x.size * 4 + w1_bf.size * 2 + w2_bf.size * 2
                      + w3_pad.size * 2 + b_pack.size * 4 + B * LANE * 4)

    out = pl.pallas_call(
        mlp_kernel,
        out_shape=jax.ShapeDtypeStruct((B, LANE), jnp.float32),
        # Grid-less: every operand is a single full-array block resident in
        # VMEM (~150 KB total) — no tiling/pipelining needed on v5e/v6e/v7x.
        # At B=2 a grid would be pure per-step overhead; if B ever reaches
        # ~256+, add a leading batch grid axis with
        # dimension_semantics=("parallel",) so v7x's two TensorCores split rows.
        in_specs=[pl.BlockSpec(memory_space=pltpu.MemorySpace.VMEM)] * 5,
        out_specs=pl.BlockSpec(memory_space=pltpu.MemorySpace.VMEM),
        cost_estimate=pl.CostEstimate(flops=flops, transcendentals=0,
                                      bytes_accessed=bytes_accessed),
    )(x, w1_bf, w2_bf, w3_pad, b_pack)

    return out[:, :num_outputs]


if __name__ == "__main__":
    num_outputs = 4
    key = jax.random.PRNGKey(0)
    k_data, k_params = jax.random.split(key)

    # NCHW input: batch=2, channels=4, spatial=16x16  ->  flatten = 1024 features
    data = jax.random.normal(k_data, (2, 4, 16, 16), dtype=jnp.float32)
    params = init_params(k_params, num_outputs)

    # One-time parameter prep (casts / padding / bias packing hoisted out of
    # the per-call path).
    prepped = prepare_params(params, num_outputs)
    prepped = jax.block_until_ready(prepped)

    out = regressor_forward(data, prepped, num_outputs)
    jax.block_until_ready(out)

    x = data.reshape(2, -1)
    w1, b1, w2, b2, w3, b3 = params

    # Reference 1: same bf16-input / f32-accumulate math as the kernel.
    xb = x.astype(jnp.bfloat16)
    r = jnp.maximum(jnp.dot(xb, w1.astype(jnp.bfloat16),
                            preferred_element_type=jnp.float32) + b1, 0.0)
    r = jnp.maximum(jnp.dot(r.astype(jnp.bfloat16), w2.astype(jnp.bfloat16),
                            preferred_element_type=jnp.float32) + b2, 0.0)
    r = jnp.dot(r.astype(jnp.bfloat16), w3.astype(jnp.bfloat16),
                preferred_element_type=jnp.float32) + b3

    # Reference 2: full-f32 math of the original torch module (loose tol for bf16).
    f = jnp.maximum(x @ w1 + b1, 0.0)
    f = jnp.maximum(f @ w2 + b2, 0.0)
    f = f @ w3 + b3

    assert out.shape == (2, num_outputs)
    assert jnp.allclose(out, r, atol=1e-3, rtol=1e-3), float(jnp.max(jnp.abs(out - r)))
    assert jnp.allclose(out, f, atol=5e-2, rtol=5e-2), float(jnp.max(jnp.abs(out - f)))

    print("KERNEL_OK")
</pallas_src>

<mosaic_0001>
module attributes {stable_mosaic.version = 11 : i64} {
  func.func @mlp_kernel(%arg0: memref<2x1024xf32, #tpu.memory_space<vmem>>, %arg1: memref<1024x64xbf16, #tpu.memory_space<vmem>>, %arg2: memref<64x32xbf16, #tpu.memory_space<vmem>>, %arg3: memref<32x128xbf16, #tpu.memory_space<vmem>>, %arg4: memref<8x128xf32, #tpu.memory_space<vmem>>, %arg5: memref<2x128xf32, #tpu.memory_space<vmem>>) attributes {dimension_semantics = [], scalar_prefetch = 0 : i64, scratch_operands = 0 : i64, tpu.core_type = #tpu.core_type<tc>} {
    %c0 = arith.constant 0 : index
    %c0_0 = arith.constant 0 : index
    %0 = vector.load %arg0[%c0, %c0_0] : memref<2x1024xf32, #tpu.memory_space<vmem>>, vector<2x1024xf32>
    %1 = arith.truncf %0 : vector<2x1024xf32> to vector<2x1024xbf16>
    %c0_1 = arith.constant 0 : index
    %c0_2 = arith.constant 0 : index
    %2 = vector.load %arg4[%c0_1, %c0_2] : memref<8x128xf32, #tpu.memory_space<vmem>>, vector<8x128xf32>
    %c0_3 = arith.constant 0 : index
    %c0_4 = arith.constant 0 : index
    %3 = vector.load %arg1[%c0_3, %c0_4] : memref<1024x64xbf16, #tpu.memory_space<vmem>>, vector<1024x64xbf16>
    %cst = arith.constant dense<0.000000e+00> : vector<2x64xf32>
    %4 = tpu.matmul %1, %3, %cst {dimension_numbers = #tpu.dot_dimension_numbers<[1], [0], [0], [1], [0, 0, 1, 1], [], []>} : vector<2x1024xbf16>, vector<1024x64xbf16>, vector<2x64xf32> -> vector<2x64xf32>
    %5 = vector.extract_strided_slice %2 {offsets = [0, 0], sizes = [1, 64], strides = [1, 1]} : vector<8x128xf32> to vector<1x64xf32>
    %6 = vector.broadcast %5 : vector<1x64xf32> to vector<2x64xf32>
    %7 = arith.addf %4, %6 : vector<2x64xf32>
    %cst_5 = arith.constant 0.000000e+00 : f32
    %8 = vector.broadcast %cst_5 : f32 to vector<2x64xf32>
    %9 = arith.maximumf %7, %8 : vector<2x64xf32>
    %10 = arith.truncf %9 : vector<2x64xf32> to vector<2x64xbf16>
    %c0_6 = arith.constant 0 : index
    %c0_7 = arith.constant 0 : index
    %11 = vector.load %arg2[%c0_6, %c0_7] : memref<64x32xbf16, #tpu.memory_space<vmem>>, vector<64x32xbf16>
    %cst_8 = arith.constant dense<0.000000e+00> : vector<2x32xf32>
    %12 = tpu.matmul %10, %11, %cst_8 {dimension_numbers = #tpu.dot_dimension_numbers<[1], [0], [0], [1], [0, 0, 1, 1], [], []>} : vector<2x64xbf16>, vector<64x32xbf16>, vector<2x32xf32> -> vector<2x32xf32>
    %13 = vector.extract_strided_slice %2 {offsets = [1, 0], sizes = [1, 32], strides = [1, 1]} : vector<8x128xf32> to vector<1x32xf32>
    %14 = vector.broadcast %13 : vector<1x32xf32> to vector<2x32xf32>
    %15 = arith.addf %12, %14 : vector<2x32xf32>
    %cst_9 = arith.constant 0.000000e+00 : f32
    %16 = vector.broadcast %cst_9 : f32 to vector<2x32xf32>
    %17 = arith.maximumf %15, %16 : vector<2x32xf32>
    %18 = arith.truncf %17 : vector<2x32xf32> to vector<2x32xbf16>
    %c0_10 = arith.constant 0 : index
    %c0_11 = arith.constant 0 : index
    %19 = vector.load %arg3[%c0_10, %c0_11] : memref<32x128xbf16, #tpu.memory_space<vmem>>, vector<32x128xbf16>
    %cst_12 = arith.constant dense<0.000000e+00> : vector<2x128xf32>
    %20 = tpu.matmul %18, %19, %cst_12 {dimension_numbers = #tpu.dot_dimension_numbers<[1], [0], [0], [1], [0, 0, 1, 1], [], []>} : vector<2x32xbf16>, vector<32x128xbf16>, vector<2x128xf32> -> vector<2x128xf32>
    %21 = vector.extract_strided_slice %2 {offsets = [2, 0], sizes = [1, 128], strides = [1, 1]} : vector<8x128xf32> to vector<1x128xf32>
    %22 = vector.broadcast %21 : vector<1x128xf32> to vector<2x128xf32>
    %23 = arith.addf %20, %22 : vector<2x128xf32>
    %c0_13 = arith.constant 0 : index
    %c0_14 = arith.constant 0 : index
    %24 = vector.load %arg5[%c0_13, %c0_14] : memref<2x128xf32, #tpu.memory_space<vmem>>, vector<2x128xf32>
    tpu.vector_store %arg5[%c0_13, %c0_14], %23 {strides = array<i32>} : memref<2x128xf32, #tpu.memory_space<vmem>>, vector<2x128xf32>,
    return
  }
}

</mosaic_0001>

<llo_original>
// kernel: regressor_forward.1
$region0: #{regressor_forward.1}
  #allocation0 [shape = 'u32[]', space=smem, size = 0x4, offset = 0x4, fixed_abs, tag = 'smem constant byte address 0x4 - core index']
  #allocation1 [shape = 'u32[144,128]{1,0:T(1,128)}', space=vmem, size = 0x12000, scoped, tag = 'internal scratch']
  %s0 = inlined_call_operand.vmem [shape: f32[2,1024], index: 0, kind: input, shape index: {}]
  %s1 = inlined_call_operand.vmem [shape: bf16[1024,64], index: 1, kind: input, shape index: {}]
  %s2 = inlined_call_operand.vmem [shape: bf16[64,32], index: 2, kind: input, shape index: {}]
  %s3 = inlined_call_operand.vmem [shape: bf16[32,128], index: 3, kind: input, shape index: {}]
  %s4 = inlined_call_operand.vmem [shape: f32[8,128], index: 4, kind: input, shape index: {}]
  %s5 = inlined_call_operand.hbm [shape: f32[2,128], index: 5, kind: output, shape index: {}]
  %s6 = sld [smem:[#allocation0]]
  $region30: #{regressor_forward.1} parent=0
    _
  %s8 = ssub.s32 1, %s6
  %s9 = scalar_select 0, %s8, %s6
  $region1: #{regressor_forward.1} parent=0
    #allocation2 [shape = 'u8[1024]{0}', space=vmem, size = 0x400, scoped, tag = 'output window, operand 0, single buffered']
    #allocation3 [shape = 's32[1]{0}', space=sflag, size = 0x4, scoped, tag = 'scoped memory for regressor_forward.1']
    %10 = vsyncpa [#allocation3], 0
    // Predicated region
    $region2: #{regressor_forward.1} parent=1 // pred_check
      _
    $region3: #{regressor_forward.1} parent=1 // pred_check_branch
      %12 = sbr.rel (0) target = $region5
    $region4: #{regressor_forward.1} parent=1 // pred_region
      _
    $region5: #{regressor_forward.1} parent=1 // pred_fallthru
      _
    // Predicated region
    $region6: #{regressor_forward.1} parent=1 // pred_check
      _
    $region7: #{regressor_forward.1} parent=1 // pred_check_branch
      %14 = sbr.rel (0) target = $region9
    $region8: #{regressor_forward.1} parent=1 // pred_region
      _
    $region9: #{regressor_forward.1} parent=1 // pred_fallthru
      _
    // Predicated region
    $region10: #{regressor_forward.1} parent=1 // pred_check
      _
    $region11: #{regressor_forward.1} parent=1 // pred_check_branch
      %16 = sbr.rel (0) target = $region13
    $region12: #{regressor_forward.1} parent=1 // pred_region
      _
    $region13: #{regressor_forward.1} parent=1 // pred_fallthru
      _
    // Predicated region
    $region14: #{regressor_forward.1} parent=1 // pred_check
      _
    $region15: #{regressor_forward.1} parent=1 // pred_check_branch
      %18 = sbr.rel (0) target = $region17
    $region16: #{regressor_forward.1} parent=1 // pred_region
      _
    $region17: #{regressor_forward.1} parent=1 // pred_fallthru
      _
    // Predicated region
    $region18: #{regressor_forward.1} parent=1 // pred_check
      _
    $region19: #{regressor_forward.1} parent=1 // pred_check_branch
      %20 = sbr.rel (0) target = $region21
    $region20: #{regressor_forward.1} parent=1 // pred_region
      _
    $region21: #{regressor_forward.1} parent=1 // pred_fallthru
      _
    %v22 = vld [vmem:[%s0] sm:$0xff]
    %v23 = vld [vmem:[%s0 + $0x8] sm:$0xff]
    %v26 = vcombine.high %v22, %v22
    %v28 = vunpack.c.l.s4 1983009808
    %v29 = vunpack.c.0.s8 %v28
    %v30 = vlaneseq
    %v31 = vshrl.u32 %v30, 7
    %v32 = vsub.s32 %v29, %v31
    %v33 = vrot.slane %v22, %v32
    %v35 = vunpack.c.l.s4 1983009808
    %v36 = vunpack.c.0.s8 %v35
    %v37 = vlaneseq
    %v38 = vshrl.u32 %v37, 7
    %v39 = vsub.s32 %v36, %v38
    %v40 = vrot.slane %v26, %v39
    %v41 = vcombine.high %v33, %v33
    %v42 = vcombine.high %v40, %v40
    %v43 = vcombine.high %v23, %v23
    %v45 = vunpack.c.l.s4 1983009808
    %v46 = vunpack.c.0.s8 %v45
    %v47 = vlaneseq
    %v48 = vshrl.u32 %v47, 7
    %v49 = vsub.s32 %v46, %v48
    %v50 = vrot.slane %v23, %v49
    %v52 = vunpack.c.l.s4 1983009808
    %v53 = vunpack.c.0.s8 %v52
    %v54 = vlaneseq
    %v55 = vshrl.u32 %v54, 7
    %v56 = vsub.s32 %v53, %v55
    %v57 = vrot.slane %v43, %v56
    %v58 = vcombine.high %v50, %v50
    %v59 = vcombine.high %v57, %v57
    %v68 = vpack.c.bf16 %v33, %v33
    %v69 = vpack.c.bf16 %v41, %v41
    %v70 = vpack.c.bf16 %v40, %v40
    %v71 = vpack.c.bf16 %v42, %v42
    %v72 = vpack.c.bf16 %v50, %v50
    %v73 = vpack.c.bf16 %v58, %v58
    %v74 = vpack.c.bf16 %v57, %v57
    %v75 = vpack.c.bf16 %v59, %v59
    %v76 = vld [vmem:[%s4] sm:$0xff]
    %v77 = vld [vmem:[%s1] sm:$0xf]
    %v78 = vld [vmem:[%s1 + $0x4] sm:$0xf]
    %v79 = vld [vmem:[%s1 + $0x8] sm:$0xf]
    %v80 = vld [vmem:[%s1 + $0xc] sm:$0xf]
    %v81 = vld [vmem:[%s1 + $0x10] sm:$0xf]
    %v82 = vld [vmem:[%s1 + $0x14] sm:$0xf]
    %v83 = vld [vmem:[%s1 + $0x18] sm:$0xf]
    %v84 = vld [vmem:[%s1 + $0x1c] sm:$0xf]
    %v85 = vld [vmem:[%s1 + $0x20] sm:$0xf]
    %v86 = vld [vmem:[%s1 + $0x24] sm:$0xf]
    %v87 = vld [vmem:[%s1 + $0x28] sm:$0xf]
    %v88 = vld [vmem:[%s1 + $0x2c] sm:$0xf]
    %v89 = vld [vmem:[%s1 + $0x30] sm:$0xf]
    %v90 = vld [vmem:[%s1 + $0x34] sm:$0xf]
    %v91 = vld [vmem:[%s1 + $0x38] sm:$0xf]
    %v92 = vld [vmem:[%s1 + $0x3c] sm:$0xf]
    %v93 = vld [vmem:[%s1 + $0x40] sm:$0xf]
    %v94 = vld [vmem:[%s1 + $0x44] sm:$0xf]
    %v95 = vld [vmem:[%s1 + $0x48] sm:$0xf]
    %v96 = vld [vmem:[%s1 + $0x4c] sm:$0xf]
    %v97 = vld [vmem:[%s1 + $0x50] sm:$0xf]
    %v98 = vld [vmem:[%s1 + $0x54] sm:$0xf]
    %v99 = vld [vmem:[%s1 + $0x58] sm:$0xf]
    %v100 = vld [vmem:[%s1 + $0x5c] sm:$0xf]
    %v101 = vld [vmem:[%s1 + $0x60] sm:$0xf]
    %v102 = vld [vmem:[%s1 + $0x64] sm:$0xf]
    %v103 = vld [vmem:[%s1 + $0x68] sm:$0xf]
    %v104 = vld [vmem:[%s1 + $0x6c] sm:$0xf]
    %v105 = vld [vmem:[%s1 + $0x70] sm:$0xf]
    %v106 = vld [vmem:[%s1 + $0x74] sm:$0xf]
    %v107 = vld [vmem:[%s1 + $0x78] sm:$0xf]
    %v108 = vld [vmem:[%s1 + $0x7c] sm:$0xf]
    %v109 = vld [vmem:[%s1 + $0x80] sm:$0xf]
    %v110 = vld [vmem:[%s1 + $0x84] sm:$0xf]
    %v111 = vld [vmem:[%s1 + $0x88] sm:$0xf]
    %v112 = vld [vmem:[%s1 + $0x8c] sm:$0xf]
    %v113 = vld [vmem:[%s1 + $0x90] sm:$0xf]
    %v114 = vld [vmem:[%s1 + $0x94] sm:$0xf]
    %v115 = vld [vmem:[%s1 + $0x98] sm:$0xf]
    %v116 = vld [vmem:[%s1 + $0x9c] sm:$0xf]
    %v117 = vld [vmem:[%s1 + $0xa0] sm:$0xf]
    %v118 = vld [vmem:[%s1 + $0xa4] sm:$0xf]
    %v119 = vld [vmem:[%s1 + $0xa8] sm:$0xf]
    %v120 = vld [vmem:[%s1 + $0xac] sm:$0xf]
    %v121 = vld [vmem:[%s1 + $0xb0] sm:$0xf]
    %v122 = vld [vmem:[%s1 + $0xb4] sm:$0xf]
    %v123 = vld [vmem:[%s1 + $0xb8] sm:$0xf]
    %v124 = vld [vmem:[%s1 + $0xbc] sm:$0xf]
    %v125 = vld [vmem:[%s1 + $0xc0] sm:$0xf]
    %v126 = vld [vmem:[%s1 + $0xc4] sm:$0xf]
    %v127 = vld [vmem:[%s1 + $0xc8] sm:$0xf]
    %v128 = vld [vmem:[%s1 + $0xcc] sm:$0xf]
    %v129 = vld [vmem:[%s1 + $0xd0] sm:$0xf]
    %v130 = vld [vmem:[%s1 + $0xd4] sm:$0xf]
    %v131 = vld [vmem:[%s1 + $0xd8] sm:$0xf]
    %v132 = vld [vmem:[%s1 + $0xdc] sm:$0xf]
    %v133 = vld [vmem:[%s1 + $0xe0] sm:$0xf]
    %v134 = vld [vmem:[%s1 + $0xe4] sm:$0xf]
    %v135 = vld [vmem:[%s1 + $0xe8] sm:$0xf]
    %v136 = vld [vmem:[%s1 + $0xec] sm:$0xf]
    %v137 = vld [vmem:[%s1 + $0xf0] sm:$0xf]
    %v138 = vld [vmem:[%s1 + $0xf4] sm:$0xf]
    %v139 = vld [vmem:[%s1 + $0xf8] sm:$0xf]
    %v140 = vld [vmem:[%s1 + $0xfc] sm:$0xf]
    %v141 = vld [vmem:[%s1 + $0x100] sm:$0xf]
    %v142 = vld [vmem:[%s1 + $0x104] sm:$0xf]
    %v143 = vld [vmem:[%s1 + $0x108] sm:$0xf]
    %v144 = vld [vmem:[%s1 + $0x10c] sm:$0xf]
    %v145 = vld [vmem:[%s1 + $0x110] sm:$0xf]
    %v146 = vld [vmem:[%s1 + $0x114] sm:$0xf]
    %v147 = vld [vmem:[%s1 + $0x118] sm:$0xf]
    %v148 = vld [vmem:[%s1 + $0x11c] sm:$0xf]
    %v149 = vld [vmem:[%s1 + $0x120] sm:$0xf]
    %v150 = vld [vmem:[%s1 + $0x124] sm:$0xf]
    %v151 = vld [vmem:[%s1 + $0x128] sm:$0xf]
    %v152 = vld [vmem:[%s1 + $0x12c] sm:$0xf]
    %v153 = vld [vmem:[%s1 + $0x130] sm:$0xf]
    %v154 = vld [vmem:[%s1 + $0x134] sm:$0xf]
    %v155 = vld [vmem:[%s1 + $0x138] sm:$0xf]
    %v156 = vld [vmem:[%s1 + $0x13c] sm:$0xf]
    %v157 = vld [vmem:[%s1 + $0x140] sm:$0xf]
    %v158 = vld [vmem:[%s1 + $0x144] sm:$0xf]
    %v159 = vld [vmem:[%s1 + $0x148] sm:$0xf]
    %v160 = vld [vmem:[%s1 + $0x14c] sm:$0xf]
    %v161 = vld [vmem:[%s1 + $0x150] sm:$0xf]
    %v162 = vld [vmem:[%s1 + $0x154] sm:$0xf]
    %v163 = vld [vmem:[%s1 + $0x158] sm:$0xf]
    %v164 = vld [vmem:[%s1 + $0x15c] sm:$0xf]
    %v165 = vld [vmem:[%s1 + $0x160] sm:$0xf]
    %v166 = vld [vmem:[%s1 + $0x164] sm:$0xf]
    %v167 = vld [vmem:[%s1 + $0x168] sm:$0xf]
    %v168 = vld [vmem:[%s1 + $0x16c] sm:$0xf]
    %v169 = vld [vmem:[%s1 + $0x170] sm:$0xf]
    %v170 = vld [vmem:[%s1 + $0x174] sm:$0xf]
    %v171 = vld [vmem:[%s1 + $0x178] sm:$0xf]
    %v172 = vld [vmem:[%s1 + $0x17c] sm:$0xf]
    %v173 = vld [vmem:[%s1 + $0x180] sm:$0xf]
    %v174 = vld [vmem:[%s1 + $0x184] sm:$0xf]
    %v175 = vld [vmem:[%s1 + $0x188] sm:$0xf]
    %v176 = vld [vmem:[%s1 + $0x18c] sm:$0xf]
    %v177 = vld [vmem:[%s1 + $0x190] sm:$0xf]
    %v178 = vld [vmem:[%s1 + $0x194] sm:$0xf]
    %v179 = vld [vmem:[%s1 + $0x198] sm:$0xf]
    %v180 = vld [vmem:[%s1 + $0x19c] sm:$0xf]
    %v181 = vld [vmem:[%s1 + $0x1a0] sm:$0xf]
    %v182 = vld [vmem:[%s1 + $0x1a4] sm:$0xf]
    %v183 = vld [vmem:[%s1 + $0x1a8] sm:$0xf]
    %v184 = vld [vmem:[%s1 + $0x1ac] sm:$0xf]
    %v185 = vld [vmem:[%s1 + $0x1b0] sm:$0xf]
    %v186 = vld [vmem:[%s1 + $0x1b4] sm:$0xf]
    %v187 = vld [vmem:[%s1 + $0x1b8] sm:$0xf]
    %v188 = vld [vmem:[%s1 + $0x1bc] sm:$0xf]
    %v189 = vld [vmem:[%s1 + $0x1c0] sm:$0xf]
    %v190 = vld [vmem:[%s1 + $0x1c4] sm:$0xf]
    %v191 = vld [vmem:[%s1 + $0x1c8] sm:$0xf]
    %v192 = vld [vmem:[%s1 + $0x1cc] sm:$0xf]
    %v193 = vld [vmem:[%s1 + $0x1d0] sm:$0xf]
    %v194 = vld [vmem:[%s1 + $0x1d4] sm:$0xf]
    %v195 = vld [vmem:[%s1 + $0x1d8] sm:$0xf]
    %v196 = vld [vmem:[%s1 + $0x1dc] sm:$0xf]
    %v197 = vld [vmem:[%s1 + $0x1e0] sm:$0xf]
    %v198 = vld [vmem:[%s1 + $0x1e4] sm:$0xf]
    %v199 = vld [vmem:[%s1 + $0x1e8] sm:$0xf]
    %v200 = vld [vmem:[%s1 + $0x1ec] sm:$0xf]
    %v201 = vld [vmem:[%s1 + $0x1f0] sm:$0xf]
    %v202 = vld [vmem:[%s1 + $0x1f4] sm:$0xf]
    %v203 = vld [vmem:[%s1 + $0x1f8] sm:$0xf]
    %v204 = vld [vmem:[%s1 + $0x1fc] sm:$0xf]
    %v205 = vlaneseq
    %v206 = vshrl.u32 %v205, 7
    %v207 = vsub.s32 0, %v206
    %v208 = vrot.slane %v76, %v207
    %v337 = vunpack.c.l.b16 %v77
    %v338 = vunpack.c.l.b16 %v78
    %v339 = vunpack.c.l.b16 %v79
    %v340 = vunpack.c.l.b16 %v80
    %v341 = vunpack.c.l.b16 %v81
    %v342 = vunpack.c.l.b16 %v82
    %v343 = vunpack.c.l.b16 %v83
    %v344 = vunpack.c.l.b16 %v84
    %v345 = vunpack.c.l.b16 %v85
    %v346 = vunpack.c.l.b16 %v86
    %v347 = vunpack.c.l.b16 %v87
    %v348 = vunpack.c.l.b16 %v88
    %v349 = vunpack.c.l.b16 %v89
    %v350 = vunpack.c.l.b16 %v90
    %v351 = vunpack.c.l.b16 %v91
    %v352 = vunpack.c.l.b16 %v92
    %v353 = vunpack.c.l.b16 %v93
    %v354 = vunpack.c.l.b16 %v94
    %v355 = vunpack.c.l.b16 %v95
    %v356 = vunpack.c.l.b16 %v96
    %v357 = vunpack.c.l.b16 %v97
    %v358 = vunpack.c.l.b16 %v98
    %v359 = vunpack.c.l.b16 %v99
    %v360 = vunpack.c.l.b16 %v100
    %v361 = vunpack.c.l.b16 %v101
    %v362 = vunpack.c.l.b16 %v102
    %v363 = vunpack.c.l.b16 %v103
    %v364 = vunpack.c.l.b16 %v104
    %v365 = vunpack.c.l.b16 %v105
    %v366 = vunpack.c.l.b16 %v106
    %v367 = vunpack.c.l.b16 %v107
    %v368 = vunpack.c.l.b16 %v108
    %v369 = vunpack.c.l.b16 %v109
    %v370 = vunpack.c.l.b16 %v110
    %v371 = vunpack.c.l.b16 %v111
    %v372 = vunpack.c.l.b16 %v112
    %v373 = vunpack.c.l.b16 %v113
    %v374 = vunpack.c.l.b16 %v114
    %v375 = vunpack.c.l.b16 %v115
    %v376 = vunpack.c.l.b16 %v116
    %v377 = vunpack.c.l.b16 %v117
    %v378 = vunpack.c.l.b16 %v118
    %v379 = vunpack.c.l.b16 %v119
    %v380 = vunpack.c.l.b16 %v120
    %v381 = vunpack.c.l.b16 %v121
    %v382 = vunpack.c.l.b16 %v122
    %v383 = vunpack.c.l.b16 %v123
    %v384 = vunpack.c.l.b16 %v124
    %v385 = vunpack.c.l.b16 %v125
    %v386 = vunpack.c.l.b16 %v126
    %v387 = vunpack.c.l.b16 %v127
    %v388 = vunpack.c.l.b16 %v128
    %v389 = vunpack.c.l.b16 %v129
    %v390 = vunpack.c.l.b16 %v130
    %v391 = vunpack.c.l.b16 %v131
    %v392 = vunpack.c.l.b16 %v132
    %v393 = vunpack.c.l.b16 %v133
    %v394 = vunpack.c.l.b16 %v134
    %v395 = vunpack.c.l.b16 %v135
    %v396 = vunpack.c.l.b16 %v136
    %v397 = vunpack.c.l.b16 %v137
    %v398 = vunpack.c.l.b16 %v138
    %v399 = vunpack.c.l.b16 %v139
    %v400 = vunpack.c.l.b16 %v140
    %v401 = vunpack.c.l.b16 %v141
    %v402 = vunpack.c.l.b16 %v142
    %v403 = vunpack.c.l.b16 %v143
    %v404 = vunpack.c.l.b16 %v144
    %v405 = vunpack.c.l.b16 %v145
    %v406 = vunpack.c.l.b16 %v146
    %v407 = vunpack.c.l.b16 %v147
    %v408 = vunpack.c.l.b16 %v148
    %v409 = vunpack.c.l.b16 %v149
    %v410 = vunpack.c.l.b16 %v150
    %v411 = vunpack.c.l.b16 %v151
    %v412 = vunpack.c.l.b16 %v152
    %v413 = vunpack.c.l.b16 %v153
    %v414 = vunpack.c.l.b16 %v154
    %v415 = vunpack.c.l.b16 %v155
    %v416 = vunpack.c.l.b16 %v156
    %v417 = vunpack.c.l.b16 %v157
    %v418 = vunpack.c.l.b16 %v158
    %v419 = vunpack.c.l.b16 %v159
    %v420 = vunpack.c.l.b16 %v160
    %v421 = vunpack.c.l.b16 %v161
    %v422 = vunpack.c.l.b16 %v162
    %v423 = vunpack.c.l.b16 %v163
    %v424 = vunpack.c.l.b16 %v164
    %v425 = vunpack.c.l.b16 %v165
    %v426 = vunpack.c.l.b16 %v166
    %v427 = vunpack.c.l.b16 %v167
    %v428 = vunpack.c.l.b16 %v168
    %v429 = vunpack.c.l.b16 %v169
    %v430 = vunpack.c.l.b16 %v170
    %v431 = vunpack.c.l.b16 %v171
    %v432 = vunpack.c.l.b16 %v172
    %v433 = vunpack.c.l.b16 %v173
    %v434 = vunpack.c.l.b16 %v174
    %v435 = vunpack.c.l.b16 %v175
    %v436 = vunpack.c.l.b16 %v176
    %v437 = vunpack.c.l.b16 %v177
    %v438 = vunpack.c.l.b16 %v178
    %v439 = vunpack.c.l.b16 %v179
    %v440 = vunpack.c.l.b16 %v180
    %v441 = vunpack.c.l.b16 %v181
    %v442 = vunpack.c.l.b16 %v182
    %v443 = vunpack.c.l.b16 %v183
    %v444 = vunpack.c.l.b16 %v184
    %v445 = vunpack.c.l.b16 %v185
    %v446 = vunpack.c.l.b16 %v186
    %v447 = vunpack.c.l.b16 %v187
    %v448 = vunpack.c.l.b16 %v188
    %v449 = vunpack.c.l.b16 %v189
    %v450 = vunpack.c.l.b16 %v190
    %v451 = vunpack.c.l.b16 %v191
    %v452 = vunpack.c.l.b16 %v192
    %v453 = vunpack.c.l.b16 %v193
    %v454 = vunpack.c.l.b16 %v194
    %v455 = vunpack.c.l.b16 %v195
    %v456 = vunpack.c.l.b16 %v196
    %v457 = vunpack.c.l.b16 %v197
    %v458 = vunpack.c.l.b16 %v198
    %v459 = vunpack.c.l.b16 %v199
    %v460 = vunpack.c.l.b16 %v200
    %v461 = vunpack.c.l.b16 %v201
    %v462 = vunpack.c.l.b16 %v202
    %v463 = vunpack.c.l.b16 %v203
    %v464 = vunpack.c.l.b16 %v204
    %v465 = vpack.c.b16 %v338, %v337
    %v466 = vpack.c.b16 %v340, %v339
    %v467 = vpack.c.b16 %v342, %v341
    %v468 = vpack.c.b16 %v344, %v343
    %v469 = vpack.c.b16 %v346, %v345
    %v470 = vpack.c.b16 %v348, %v347
    %v471 = vpack.c.b16 %v350, %v349
    %v472 = vpack.c.b16 %v352, %v351
    %v473 = vpack.c.b16 %v354, %v353
    %v474 = vpack.c.b16 %v356, %v355
    %v475 = vpack.c.b16 %v358, %v357
    %v476 = vpack.c.b16 %v360, %v359
    %v477 = vpack.c.b16 %v362, %v361
    %v478 = vpack.c.b16 %v364, %v363
    %v479 = vpack.c.b16 %v366, %v365
    %v480 = vpack.c.b16 %v368, %v367
    %v481 = vpack.c.b16 %v370, %v369
    %v482 = vpack.c.b16 %v372, %v371
    %v483 = vpack.c.b16 %v374, %v373
    %v484 = vpack.c.b16 %v376, %v375
    %v485 = vpack.c.b16 %v378, %v377
    %v486 = vpack.c.b16 %v380, %v379
    %v487 = vpack.c.b16 %v382, %v381
    %v488 = vpack.c.b16 %v384, %v383
    %v489 = vpack.c.b16 %v386, %v385
    %v490 = vpack.c.b16 %v388, %v387
    %v491 = vpack.c.b16 %v390, %v389
    %v492 = vpack.c.b16 %v392, %v391
    %v493 = vpack.c.b16 %v394, %v393
    %v494 = vpack.c.b16 %v396, %v395
    %v495 = vpack.c.b16 %v398, %v397
    %v496 = vpack.c.b16 %v400, %v399
    %v497 = vpack.c.b16 %v402, %v401
    %v498 = vpack.c.b16 %v404, %v403
    %v499 = vpack.c.b16 %v406, %v405
    %v500 = vpack.c.b16 %v408, %v407
    %v501 = vpack.c.b16 %v410, %v409
    %v502 = vpack.c.b16 %v412, %v411
    %v503 = vpack.c.b16 %v414, %v413
    %v504 = vpack.c.b16 %v416, %v415
    %v505 = vpack.c.b16 %v418, %v417
    %v506 = vpack.c.b16 %v420, %v419
    %v507 = vpack.c.b16 %v422, %v421
    %v508 = vpack.c.b16 %v424, %v423
    %v509 = vpack.c.b16 %v426, %v425
    %v510 = vpack.c.b16 %v428, %v427
    %v511 = vpack.c.b16 %v430, %v429
    %v512 = vpack.c.b16 %v432, %v431
    %v513 = vpack.c.b16 %v434, %v433
    %v514 = vpack.c.b16 %v436, %v435
    %v515 = vpack.c.b16 %v438, %v437
    %v516 = vpack.c.b16 %v440, %v439
    %v517 = vpack.c.b16 %v442, %v441
    %v518 = vpack.c.b16 %v444, %v443
    %v519 = vpack.c.b16 %v446, %v445
    %v520 = vpack.c.b16 %v448, %v447
    %v521 = vpack.c.b16 %v450, %v449
    %v522 = vpack.c.b16 %v452, %v451
    %v523 = vpack.c.b16 %v454, %v453
    %v524 = vpack.c.b16 %v456, %v455
    %v525 = vpack.c.b16 %v458, %v457
    %v526 = vpack.c.b16 %v460, %v459
    %v527 = vpack.c.b16 %v462, %v461
    %v528 = vpack.c.b16 %v464, %v463
    %593 = vmatprep.subr.bf16.mxu0 0
    %594 = vmatpush1.bf16.msra.mxu0 %v472
    %595 = vmatprep.subr.bf16.mxu0 0
    %596 = vmatpush1.bf16.msra.mxu0 %v471
    %597 = vmatprep.subr.bf16.mxu0 0
    %598 = vmatpush1.bf16.msra.mxu0 %v470
    %599 = vmatprep.subr.bf16.mxu0 0
    %600 = vmatpush1.bf16.msra.mxu0 %v469
    %601 = vmatprep.subr.bf16.mxu0 0
    %602 = vmatpush1.bf16.msra.mxu0 %v468
    %603 = vmatprep.subr.bf16.mxu0 0
    %604 = vmatpush1.bf16.msra.mxu0 %v467
    %605 = vmatprep.subr.bf16.mxu0 0
    %606 = vmatpush1.bf16.msra.mxu0 %v466
    %607 = vmatprep.subr.bf16.mxu0 0
    %608 = vmatpush1.bf16.msra.mxu0 %v465
    %609 = vmatprep.subr.bf16.mxu0 0
    %610 = vmatpush2.bf16.msra.mxu0 %v480
    %611 = vmatprep.subr.bf16.mxu0 0
    %612 = vmatpush2.bf16.msra.mxu0 %v479
    %613 = vmatprep.subr.bf16.mxu0 0
    %614 = vmatpush2.bf16.msra.mxu0 %v478
    %615 = vmatprep.subr.bf16.mxu0 0
    %616 = vmatpush2.bf16.msra.mxu0 %v477
    %617 = vmatprep.subr.bf16.mxu0 0
    %618 = vmatpush2.bf16.msra.mxu0 %v476
    %619 = vmatprep.subr.bf16.mxu0 0
    %620 = vmatpush2.bf16.msra.mxu0 %v475
    %621 = vmatprep.subr.bf16.mxu0 0
    %622 = vmatpush2.bf16.msra.mxu0 %v474
    %623 = vmatprep.subr.bf16.mxu0 0
    %624 = vmatpush2.bf16.msra.mxu0 %v473
    %625 = vmatprep.mubr.bf16.mxu0 %v69
    %626 = vmatmul.mubr.bf16.gmra.mxu0 %v68
    %v627 = vpop.f32.mrf.mxu0
    %v628 = vadd.f32 %v208, %v627
    %v629 = vpop.f32.mrf.mxu0
    %v630 = vpop.f32.mrf.mxu0
    %v631 = vpop.f32.mrf.mxu0
    %632 = vdwg.mxu0
    %633 = vmatprep.subr.bf16.mxu0 0
    %634 = vmatpush1.bf16.msra.mxu0 %v488
    %635 = vmatprep.subr.bf16.mxu0 0
    %636 = vmatpush1.bf16.msra.mxu0 %v487
    %637 = vmatprep.subr.bf16.mxu0 0
    %638 = vmatpush1.bf16.msra.mxu0 %v486
    %639 = vmatprep.subr.bf16.mxu0 0
    %640 = vmatpush1.bf16.msra.mxu0 %v485
    %641 = vmatprep.subr.bf16.mxu0 0
    %642 = vmatpush1.bf16.msra.mxu0 %v484
    %643 = vmatprep.subr.bf16.mxu0 0
    %644 = vmatpush1.bf16.msra.mxu0 %v483
    %645 = vmatprep.subr.bf16.mxu0 0
    %646 = vmatpush1.bf16.msra.mxu0 %v482
    %647 = vmatprep.subr.bf16.mxu0 0
    %648 = vmatpush1.bf16.msra.mxu0 %v481
    %649 = vmatprep.subr.bf16.mxu0 0
    %650 = vmatpush2.bf16.msra.mxu0 %v496
    %651 = vmatprep.subr.bf16.mxu0 0
    %652 = vmatpush2.bf16.msra.mxu0 %v495
    %653 = vmatprep.subr.bf16.mxu0 0
    %654 = vmatpush2.bf16.msra.mxu0 %v494
    %655 = vmatprep.subr.bf16.mxu0 0
    %656 = vmatpush2.bf16.msra.mxu0 %v493
    %657 = vmatprep.subr.bf16.mxu0 0
    %658 = vmatpush2.bf16.msra.mxu0 %v492
    %659 = vmatprep.subr.bf16.mxu0 0
    %660 = vmatpush2.bf16.msra.mxu0 %v491
    %661 = vmatprep.subr.bf16.mxu0 0
    %662 = vmatpush2.bf16.msra.mxu0 %v490
    %663 = vmatprep.subr.bf16.mxu0 0
    %664 = vmatpush2.bf16.msra.mxu0 %v489
    %665 = vmatprep.mubr.bf16.mxu0 %v71
    %666 = vmatmul.mubr.bf16.gmra.mxu0 %v70
    %v667 = vpop.f32.mrf.mxu0
    %v668 = vadd.f32 %v628, %v667
    %v669 = vpop.f32.mrf.mxu0
    %v670 = vpop.f32.mrf.mxu0
    %v671 = vpop.f32.mrf.mxu0
    %672 = vdwg.mxu0
    %673 = vmatprep.subr.bf16.mxu0 0
    %674 = vmatpush1.bf16.msra.mxu0 %v504
    %675 = vmatprep.subr.bf16.mxu0 0
    %676 = vmatpush1.bf16.msra.mxu0 %v503
    %677 = vmatprep.subr.bf16.mxu0 0
    %678 = vmatpush1.bf16.msra.mxu0 %v502
    %679 = vmatprep.subr.bf16.mxu0 0
    %680 = vmatpush1.bf16.msra.mxu0 %v501
    %681 = vmatprep.subr.bf16.mxu0 0
    %682 = vmatpush1.bf16.msra.mxu0 %v500
    %683 = vmatprep.subr.bf16.mxu0 0
    %684 = vmatpush1.bf16.msra.mxu0 %v499
    %685 = vmatprep.subr.bf16.mxu0 0
    %686 = vmatpush1.bf16.msra.mxu0 %v498
    %687 = vmatprep.subr.bf16.mxu0 0
    %688 = vmatpush1.bf16.msra.mxu0 %v497
    %689 = vmatprep.subr.bf16.mxu0 0
    %690 = vmatpush2.bf16.msra.mxu0 %v512
    %691 = vmatprep.subr.bf16.mxu0 0
    %692 = vmatpush2.bf16.msra.mxu0 %v511
    %693 = vmatprep.subr.bf16.mxu0 0
    %694 = vmatpush2.bf16.msra.mxu0 %v510
    %695 = vmatprep.subr.bf16.mxu0 0
    %696 = vmatpush2.bf16.msra.mxu0 %v509
    %697 = vmatprep.subr.bf16.mxu0 0
    %698 = vmatpush2.bf16.msra.mxu0 %v508
    %699 = vmatprep.subr.bf16.mxu0 0
    %700 = vmatpush2.bf16.msra.mxu0 %v507
    %701 = vmatprep.subr.bf16.mxu0 0
    %702 = vmatpush2.bf16.msra.mxu0 %v506
    %703 = vmatprep.subr.bf16.mxu0 0
    %704 = vmatpush2.bf16.msra.mxu0 %v505
    %705 = vmatprep.mubr.bf16.mxu0 %v73
    %706 = vmatmul.mubr.bf16.gmra.mxu0 %v72
    %v707 = vpop.f32.mrf.mxu0
    %v708 = vadd.f32 %v668, %v707
    %v709 = vpop.f32.mrf.mxu0
    %v710 = vpop.f32.mrf.mxu0
    %v711 = vpop.f32.mrf.mxu0
    %712 = vdwg.mxu0
    %713 = vmatprep.subr.bf16.mxu0 0
    %714 = vmatpush1.bf16.msra.mxu0 %v520
    %715 = vmatprep.subr.bf16.mxu0 0
    %716 = vmatpush1.bf16.msra.mxu0 %v519
    %717 = vmatprep.subr.bf16.mxu0 0
    %718 = vmatpush1.bf16.msra.mxu0 %v518
    %719 = vmatprep.subr.bf16.mxu0 0
    %720 = vmatpush1.bf16.msra.mxu0 %v517
    %721 = vmatprep.subr.bf16.mxu0 0
    %722 = vmatpush1.bf16.msra.mxu0 %v516
    %723 = vmatprep.subr.bf16.mxu0 0
    %724 = vmatpush1.bf16.msra.mxu0 %v515
    %725 = vmatprep.subr.bf16.mxu0 0
    %726 = vmatpush1.bf16.msra.mxu0 %v514
    %727 = vmatprep.subr.bf16.mxu0 0
    %728 = vmatpush1.bf16.msra.mxu0 %v513
    %729 = vmatprep.subr.bf16.mxu0 0
    %730 = vmatpush2.bf16.msra.mxu0 %v528
    %731 = vmatprep.subr.bf16.mxu0 0
    %732 = vmatpush2.bf16.msra.mxu0 %v527
    %733 = vmatprep.subr.bf16.mxu0 0
    %734 = vmatpush2.bf16.msra.mxu0 %v526
    %735 = vmatprep.subr.bf16.mxu0 0
    %736 = vmatpush2.bf16.msra.mxu0 %v525
    %737 = vmatprep.subr.bf16.mxu0 0
    %738 = vmatpush2.bf16.msra.mxu0 %v524
    %739 = vmatprep.subr.bf16.mxu0 0
    %740 = vmatpush2.bf16.msra.mxu0 %v523
    %741 = vmatprep.subr.bf16.mxu0 0
    %742 = vmatpush2.bf16.msra.mxu0 %v522
    %743 = vmatprep.subr.bf16.mxu0 0
    %744 = vmatpush2.bf16.msra.mxu0 %v521
    %745 = vmatprep.mubr.bf16.mxu0 %v75
    %746 = vmatmul.mubr.bf16.gmra.mxu0 %v74
    %v747 = vpop.f32.mrf.mxu0
    %v748 = vadd.f32 %v708, %v747
    %v749 = vpop.f32.mrf.mxu0
    %v750 = vpop.f32.mrf.mxu0
    %v751 = vpop.f32.mrf.mxu0
    %752 = vdwg.mxu0
    %v753 = vmax.f32 %v748, 0.0
    %v754 = vpack.c.bf16 %v753, %v753
    %v755 = vld [vmem:[%s2] sm:$0xf]
    %v756 = vld [vmem:[%s2 + $0x4] sm:$0xf]
    %v757 = vld [vmem:[%s2 + $0x8] sm:$0xf]
    %v758 = vld [vmem:[%s2 + $0xc] sm:$0xf]
    %v759 = vld [vmem:[%s2 + $0x10] sm:$0xf]
    %v760 = vld [vmem:[%s2 + $0x14] sm:$0xf]
    %v761 = vld [vmem:[%s2 + $0x18] sm:$0xf]
    %v762 = vld [vmem:[%s2 + $0x1c] sm:$0xf]
    %v763 = vlaneseq
    %v764 = vshrl.u32 %v763, 7
    %v765 = vsub.s32 1, %v764
    %v766 = vrot.slane %v76, %v765
    %v775 = vunpack.c.l.b16 %v755
    %v776 = vunpack.c.l.b16 %v756
    %v777 = vunpack.c.l.b16 %v757
    %v778 = vunpack.c.l.b16 %v758
    %v779 = vunpack.c.l.b16 %v759
    %v780 = vunpack.c.l.b16 %v760
    %v781 = vunpack.c.l.b16 %v761
    %v782 = vunpack.c.l.b16 %v762
    %v783 = vpack.c.b16 %v776, %v775
    %v784 = vpack.c.b16 %v778, %v777
    %v785 = vpack.c.b16 %v780, %v779
    %v786 = vpack.c.b16 %v782, %v781
    %vm791 = vcmask 523264
    %v793 = vsel %vm791, %v754, 0
    %795 = vmatprep.subr.bf16.mxu0 0
    %796 = vmatpush1.bf16.msra.mxu0 0
    %797 = vmatprep.subr.bf16.mxu0 0
    %798 = vmatpush1.bf16.msra.mxu0 0
    %799 = vmatprep.subr.bf16.mxu0 0
    %800 = vmatpush1.bf16.msra.mxu0 0
    %801 = vmatprep.subr.bf16.mxu0 0
    %802 = vmatpush1.bf16.msra.mxu0 0
    %803 = vmatprep.subr.bf16.mxu0 0
    %804 = vmatpush1.bf16.msra.mxu0 %v786
    %805 = vmatprep.subr.bf16.mxu0 0
    %806 = vmatpush1.bf16.msra.mxu0 %v785
    %807 = vmatprep.subr.bf16.mxu0 0
    %808 = vmatpush1.bf16.msra.mxu0 %v784
    %809 = vmatprep.subr.bf16.mxu0 0
    %810 = vmatpush1.bf16.msra.mxu0 %v783
    %811 = vmatprep.subr.bf16.mxu0 0
    %812 = vmatpush2.bf16.msra.mxu0 0
    %813 = vmatprep.subr.bf16.mxu0 0
    %814 = vmatpush2.bf16.msra.mxu0 0
    %815 = vmatprep.subr.bf16.mxu0 0
    %816 = vmatpush2.bf16.msra.mxu0 0
    %817 = vmatprep.subr.bf16.mxu0 0
    %818 = vmatpush2.bf16.msra.mxu0 0
    %819 = vmatprep.subr.bf16.mxu0 0
    %820 = vmatpush2.bf16.msra.mxu0 0
    %821 = vmatprep.subr.bf16.mxu0 0
    %822 = vmatpush2.bf16.msra.mxu0 0
    %823 = vmatprep.subr.bf16.mxu0 0
    %824 = vmatpush2.bf16.msra.mxu0 0
    %825 = vmatprep.subr.bf16.mxu0 0
    %826 = vmatpush2.bf16.msra.mxu0 0
    %827 = vmatprep.mubr.bf16.mxu0 0
    %828 = vmatmul.mubr.bf16.gmra.mxu0 %v793
    %v829 = vpop.f32.mrf.mxu0
    %v830 = vadd.f32 %v766, %v829
    %v831 = vpop.f32.mrf.mxu0
    %v832 = vpop.f32.mrf.mxu0
    %v833 = vpop.f32.mrf.mxu0
    %834 = vdwg.mxu0
    %v835 = vmax.f32 %v830, 0.0
    %v836 = vpack.c.bf16 %v835, %v835
    %v837 = vld [vmem:[%s3] sm:$0xf]
    %v838 = vld [vmem:[%s3 + $0x4] sm:$0xf]
    %v839 = vld [vmem:[%s3 + $0x8] sm:$0xf]
    %v840 = vld [vmem:[%s3 + $0xc] sm:$0xf]
    %v841 = vlaneseq
    %v842 = vshrl.u32 %v841, 7
    %v843 = vsub.s32 2, %v842
    %v844 = vrot.slane %v76, %v843
    %v849 = vunpack.c.l.b16 %v837
    %v850 = vunpack.c.l.b16 %v838
    %v851 = vunpack.c.l.b16 %v839
    %v852 = vunpack.c.l.b16 %v840
    %v853 = vpack.c.b16 %v850, %v849
    %v854 = vpack.c.b16 %v852, %v851
    %vm857 = vcmask 261120
    %v859 = vsel %vm857, %v836, 0
    %861 = vmatprep.subr.bf16.mxu0 0
    %862 = vmatpush1.bf16.msra.mxu0 0
    %863 = vmatprep.subr.bf16.mxu0 0
    %864 = vmatpush1.bf16.msra.mxu0 0
    %865 = vmatprep.subr.bf16.mxu0 0
    %866 = vmatpush1.bf16.msra.mxu0 0
    %867 = vmatprep.subr.bf16.mxu0 0
    %868 = vmatpush1.bf16.msra.mxu0 0
    %869 = vmatprep.subr.bf16.mxu0 0
    %870 = vmatpush1.bf16.msra.mxu0 0
    %871 = vmatprep.subr.bf16.mxu0 0
    %872 = vmatpush1.bf16.msra.mxu0 0
    %873 = vmatprep.subr.bf16.mxu0 0
    %874 = vmatpush1.bf16.msra.mxu0 %v854
    %875 = vmatprep.subr.bf16.mxu0 0
    %876 = vmatpush1.bf16.msra.mxu0 %v853
    %877 = vmatprep.subr.bf16.mxu0 0
    %878 = vmatpush2.bf16.msra.mxu0 0
    %879 = vmatprep.subr.bf16.mxu0 0
    %880 = vmatpush2.bf16.msra.mxu0 0
    %881 = vmatprep.subr.bf16.mxu0 0
    %882 = vmatpush2.bf16.msra.mxu0 0
    %883 = vmatprep.subr.bf16.mxu0 0
    %884 = vmatpush2.bf16.msra.mxu0 0
    %885 = vmatprep.subr.bf16.mxu0 0
    %886 = vmatpush2.bf16.msra.mxu0 0
    %887 = vmatprep.subr.bf16.mxu0 0
    %888 = vmatpush2.bf16.msra.mxu0 0
    %889 = vmatprep.subr.bf16.mxu0 0
    %890 = vmatpush2.bf16.msra.mxu0 0
    %891 = vmatprep.subr.bf16.mxu0 0
    %892 = vmatpush2.bf16.msra.mxu0 0
    %893 = vmatprep.mubr.bf16.mxu0 0
    %894 = vmatmul.mubr.bf16.gmra.mxu0 %v859
    %v895 = vpop.f32.mrf.mxu0
    %v896 = vadd.f32 %v844, %v895
    %v897 = vpop.f32.mrf.mxu0
    %v898 = vpop.f32.mrf.mxu0
    %v899 = vpop.f32.mrf.mxu0
    %900 = vdwg.mxu0
    %901 = vst [vmem:[#allocation2] sm:$0x3] %v896
    // Predicated region
    $region22: #{regressor_forward.1} parent=1 // pred_check
      _
    $region23: #{regressor_forward.1} parent=1 // pred_check_branch
      %903 = sbr.rel (0) target = $region25
    $region24: #{regressor_forward.1} parent=1 // pred_region
      %s905 = ssub.s32 32, 32
      %906 = vsyncadd [#allocation3], %s905
      %s908 = sshll.u32 [#allocation2], 4
      %s909 = int_to_ptr.vmem [resolvable:$true] %s908
      %911 = dma.vmem_to_hbm [thread:$0]  %s909, 32, %s5, [#allocation3]
    $region25: #{regressor_forward.1} parent=1 // pred_fallthru
      _
    // Predicated region
    $region26: #{regressor_forward.1} parent=1 // pred_check
      _
    $region27: #{regressor_forward.1} parent=1 // pred_check_branch
      %913 = sbr.rel (0) target = $region29
    $region28: #{regressor_forward.1} parent=1 // pred_region
      %914 = dma.done [#allocation3], 32
    $region29: #{regressor_forward.1} parent=1 // pred_fallthru
      _
    %915 = vsyncpa [#allocation3], 1

</llo_original>
